<compile_context>
chip_gen: v7x
topology: tpu7x:2x2x1
jax: 0.10.0
libtpu: 0.0.40
codegen_flags: <defaults>
</compile_context>

<pallas_src>
import jax
import jax.numpy as jnp
from jax.experimental import pallas as pl
from jax.experimental.pallas import tpu as pltpu

_LANE = 128       # lane width
_SUBLANE = 8      # f32 sublane tile
_KBLK_ROWS = 256  # K-block = 256 rows x 128 lanes = 32K elements of D / step


def _linear_kernel(x_ref, w_ref, bias_ref, o_ref, acc_ref):
    # x_ref:    (B, KBLK, 128) f32 VMEM -- one K-slab of the flattened input
    # w_ref:    (O, KBLK, 128) f32 VMEM -- matching K-slab of the weight
    # bias_ref: (B*O, 1)       f32 VMEM -- bias per (b, o) output row
    # o_ref:    (B*O, 1)       f32 VMEM -- output, resident across the K grid
    # acc_ref:  (B*O, 128)     f32 VMEM scratch -- lane-wise partial sums
    k = pl.program_id(0)
    n_b = x_ref.shape[0]
    n_o = w_ref.shape[0]

    @pl.when(k == 0)
    def _init():
        acc_ref[...] = jnp.zeros_like(acc_ref)

    # VPU multiply-accumulate (the contraction is far too skinny for the MXU):
    # for each of the B*O outputs, elementwise-multiply the two lane-dense
    # (KBLK, 128) slabs and reduce over the sublane axis only; the cross-lane
    # reduce is deferred to the final grid step.
    for bi in range(n_b):
        xb = x_ref[bi]                                             # (KBLK, 128)
        for oi in range(n_o):
            part = jnp.sum(xb * w_ref[oi], axis=0, keepdims=True)  # (1, 128)
            acc_ref[pl.ds(bi * n_o + oi, 1), :] += part

    @pl.when(k == pl.num_programs(0) - 1)
    def _finalize():
        z = jnp.sum(acc_ref[...], axis=-1, keepdims=True)          # (B*O, 1)
        o_ref[...] = (z + bias_ref[...]).astype(o_ref.dtype)


def softmax_module_forward(x_nchw, weight, bias):
    """Equivalent of SoftMax.forward: z = Linear(flatten(x)).

    x_nchw: (B, C, H, W) float32
    weight: (O, D) float32   (PyTorch nn.Linear convention, D = C*H*W)
    bias:   (O,)   float32
    returns (B, O) float32
    """
    B = x_nchw.shape[0]
    O, D = weight.shape

    # --- lane-dense layout: pad D up to n_k * KBLK rows of 128 lanes --------
    rows = pl.cdiv(D, _LANE)                       # 128-lane rows of D
    rows = pl.cdiv(rows, _SUBLANE) * _SUBLANE      # sublane-align row count
    kblk = min(rows, _KBLK_ROWS)                   # rows of D per K step
    n_k = pl.cdiv(rows, kblk)
    rows_p = n_k * kblk
    d_pad = rows_p * _LANE - D                     # zero pad: dot-neutral

    x_flat = x_nchw.reshape(B, D).astype(jnp.float32)          # x.view(B, -1)
    x_slab = jnp.pad(x_flat, ((0, 0), (0, d_pad))).reshape(B, rows_p, _LANE)
    w_slab = jnp.pad(weight.astype(jnp.float32),
                     ((0, 0), (0, d_pad))).reshape(O, rows_p, _LANE)

    # bias replicated per (b, o) row of the (B*O, 1) kernel output
    bias_col = jnp.tile(bias.astype(jnp.float32), (B,)).reshape(B * O, 1)

    out = pl.pallas_call(
        _linear_kernel,
        out_shape=jax.ShapeDtypeStruct((B * O, 1), jnp.float32),
        grid_spec=pltpu.PrefetchScalarGridSpec(
            num_scalar_prefetch=0,
            grid=(n_k,),
            in_specs=[
                pl.BlockSpec((B, kblk, _LANE), lambda k: (0, k, 0)),
                pl.BlockSpec((O, kblk, _LANE), lambda k: (0, k, 0)),
                pl.BlockSpec((B * O, 1), lambda k: (0, 0)),
            ],
            out_specs=pl.BlockSpec((B * O, 1), lambda k: (0, 0)),
            scratch_shapes=[pltpu.VMEM((B * O, _LANE), jnp.float32)],
        ),
        compiler_params=pltpu.CompilerParams(
            dimension_semantics=("arbitrary",),
        ),
    )(x_slab, w_slab, bias_col)

    return out.reshape(B, O)


if __name__ == "__main__":
    # Small shapes consistent with the module: NCHW image input, flattened,
    # then Linear(input_size -> output_size=2).
    B, C, H, W = 2, 3, 16, 16
    input_size = C * H * W   # 768 (small-scale stand-in for 3*227*227)
    output_size = 2

    key = jax.random.PRNGKey(0)
    kx, kw, kb = jax.random.split(key, 3)

    x = jax.random.normal(kx, (B, C, H, W), dtype=jnp.float32)

    # Deterministic nn.Linear-style init: U(-1/sqrt(D), 1/sqrt(D)).
    bound = 1.0 / jnp.sqrt(jnp.float32(input_size))
    weight = jax.random.uniform(
        kw, (output_size, input_size), dtype=jnp.float32,
        minval=-bound, maxval=bound)
    bias = jax.random.uniform(
        kb, (output_size,), dtype=jnp.float32,
        minval=-bound, maxval=bound)

    z = softmax_module_forward(x, weight, bias)
    z = jax.block_until_ready(z)

    # Sanity check against plain-JAX reference (accumulation order differs).
    ref = x.reshape(B, -1) @ weight.T + bias
    assert z.shape == (B, output_size)
    assert jnp.allclose(z, ref, atol=1e-4, rtol=1e-4)

    print("KERNEL_OK")
</pallas_src>

<mosaic_0001>
module attributes {stable_mosaic.version = 11 : i64} {
  func.func @_linear_kernel(%arg0: i32, %arg1: memref<2x8x128xf32, #tpu.memory_space<vmem>>, %arg2: memref<2x8x128xf32, #tpu.memory_space<vmem>>, %arg3: memref<4x1xf32, #tpu.memory_space<vmem>>, %arg4: memref<4x1xf32, #tpu.memory_space<vmem>>, %arg5: memref<4x128xf32, #tpu.memory_space<vmem>>) attributes {dimension_semantics = [#tpu.dimension_semantics<arbitrary>], iteration_bounds = array<i64: 1>, scalar_prefetch = 0 : i64, scratch_operands = 1 : i64, tpu.core_type = #tpu.core_type<tc>, window_params = [{transform_indices = @transform_0, window_bounds = array<i64: 2, 8, 128>}, {transform_indices = @transform_1, window_bounds = array<i64: 2, 8, 128>}, {pipeline_mode = #tpu.pipeline_mode<synchronous>, transform_indices = @transform_2, window_bounds = array<i64: 4, 1>}, {pipeline_mode = #tpu.pipeline_mode<synchronous>, transform_indices = @transform_3, window_bounds = array<i64: 4, 1>}]} {
    %c0_i32 = arith.constant 0 : i32
    %0 = arith.cmpi eq, %arg0, %c0_i32 : i32
    %1 = arith.extui %0 : i1 to i32
    %c0_i32_0 = arith.constant 0 : i32
    %2 = arith.cmpi ne, %1, %c0_i32_0 : i32
    scf.if %2 {
      %cst_36 = arith.constant 0.000000e+00 : f32
      %42 = vector.broadcast %cst_36 : f32 to vector<4x128xf32>
      %c0_37 = arith.constant 0 : index
      %c0_38 = arith.constant 0 : index
      %43 = vector.load %arg5[%c0_37, %c0_38] : memref<4x128xf32, #tpu.memory_space<vmem>>, vector<4x128xf32>
      tpu.vector_store %arg5[%c0_37, %c0_38], %42 {strides = array<i32>} : memref<4x128xf32, #tpu.memory_space<vmem>>, vector<4x128xf32>,
    } else {
    }
    %c0 = arith.constant 0 : index
    %c0_1 = arith.constant 0 : index
    %c0_2 = arith.constant 0 : index
    %3 = vector.load %arg1[%c0, %c0_1, %c0_2] : memref<2x8x128xf32, #tpu.memory_space<vmem>>, vector<1x8x128xf32>
    %4 = vector.shape_cast %3 : vector<1x8x128xf32> to vector<8x128xf32>
    %c0_3 = arith.constant 0 : index
    %c0_4 = arith.constant 0 : index
    %c0_5 = arith.constant 0 : index
    %5 = vector.load %arg2[%c0_3, %c0_4, %c0_5] : memref<2x8x128xf32, #tpu.memory_space<vmem>>, vector<1x8x128xf32>
    %6 = vector.shape_cast %5 : vector<1x8x128xf32> to vector<8x128xf32>
    %7 = arith.mulf %4, %6 : vector<8x128xf32>
    %cst = arith.constant dense<0.000000e+00> : vector<128xf32>
    %8 = vector.multi_reduction <add>, %7, %cst [0] : vector<8x128xf32> to vector<128xf32>
    %9 = vector.shape_cast %8 : vector<128xf32> to vector<1x128xf32>
    %c0_6 = arith.constant 0 : index
    %c0_7 = arith.constant 0 : index
    %10 = vector.load %arg5[%c0_6, %c0_7] : memref<4x128xf32, #tpu.memory_space<vmem>>, vector<1x128xf32>
    %11 = arith.addf %10, %9 : vector<1x128xf32>
    %c0_8 = arith.constant 0 : index
    %c0_9 = arith.constant 0 : index
    %12 = vector.load %arg5[%c0_8, %c0_9] : memref<4x128xf32, #tpu.memory_space<vmem>>, vector<1x128xf32>
    tpu.vector_store %arg5[%c0_8, %c0_9], %11 {strides = array<i32>} : memref<4x128xf32, #tpu.memory_space<vmem>>, vector<1x128xf32>,
    %c1 = arith.constant 1 : index
    %c0_10 = arith.constant 0 : index
    %c0_11 = arith.constant 0 : index
    %13 = vector.load %arg2[%c1, %c0_10, %c0_11] : memref<2x8x128xf32, #tpu.memory_space<vmem>>, vector<1x8x128xf32>
    %14 = vector.shape_cast %13 : vector<1x8x128xf32> to vector<8x128xf32>
    %15 = arith.mulf %4, %14 : vector<8x128xf32>
    %cst_12 = arith.constant dense<0.000000e+00> : vector<128xf32>
    %16 = vector.multi_reduction <add>, %15, %cst_12 [0] : vector<8x128xf32> to vector<128xf32>
    %17 = vector.shape_cast %16 : vector<128xf32> to vector<1x128xf32>
    %c1_13 = arith.constant 1 : index
    %c0_14 = arith.constant 0 : index
    %18 = vector.load %arg5[%c1_13, %c0_14] : memref<4x128xf32, #tpu.memory_space<vmem>>, vector<1x128xf32>
    %19 = arith.addf %18, %17 : vector<1x128xf32>
    %c1_15 = arith.constant 1 : index
    %c0_16 = arith.constant 0 : index
    %20 = vector.load %arg5[%c1_15, %c0_16] : memref<4x128xf32, #tpu.memory_space<vmem>>, vector<1x128xf32>
    tpu.vector_store %arg5[%c1_15, %c0_16], %19 {strides = array<i32>} : memref<4x128xf32, #tpu.memory_space<vmem>>, vector<1x128xf32>,
    %c1_17 = arith.constant 1 : index
    %c0_18 = arith.constant 0 : index
    %c0_19 = arith.constant 0 : index
    %21 = vector.load %arg1[%c1_17, %c0_18, %c0_19] : memref<2x8x128xf32, #tpu.memory_space<vmem>>, vector<1x8x128xf32>
    %22 = vector.shape_cast %21 : vector<1x8x128xf32> to vector<8x128xf32>
    %c0_20 = arith.constant 0 : index
    %c0_21 = arith.constant 0 : index
    %c0_22 = arith.constant 0 : index
    %23 = vector.load %arg2[%c0_20, %c0_21, %c0_22] : memref<2x8x128xf32, #tpu.memory_space<vmem>>, vector<1x8x128xf32>
    %24 = vector.shape_cast %23 : vector<1x8x128xf32> to vector<8x128xf32>
    %25 = arith.mulf %22, %24 : vector<8x128xf32>
    %cst_23 = arith.constant dense<0.000000e+00> : vector<128xf32>
    %26 = vector.multi_reduction <add>, %25, %cst_23 [0] : vector<8x128xf32> to vector<128xf32>
    %27 = vector.shape_cast %26 : vector<128xf32> to vector<1x128xf32>
    %c2 = arith.constant 2 : index
    %c0_24 = arith.constant 0 : index
    %28 = vector.load %arg5[%c2, %c0_24] : memref<4x128xf32, #tpu.memory_space<vmem>>, vector<1x128xf32>
    %29 = arith.addf %28, %27 : vector<1x128xf32>
    %c2_25 = arith.constant 2 : index
    %c0_26 = arith.constant 0 : index
    %30 = vector.load %arg5[%c2_25, %c0_26] : memref<4x128xf32, #tpu.memory_space<vmem>>, vector<1x128xf32>
    tpu.vector_store %arg5[%c2_25, %c0_26], %29 {strides = array<i32>} : memref<4x128xf32, #tpu.memory_space<vmem>>, vector<1x128xf32>,
    %c1_27 = arith.constant 1 : index
    %c0_28 = arith.constant 0 : index
    %c0_29 = arith.constant 0 : index
    %31 = vector.load %arg2[%c1_27, %c0_28, %c0_29] : memref<2x8x128xf32, #tpu.memory_space<vmem>>, vector<1x8x128xf32>
    %32 = vector.shape_cast %31 : vector<1x8x128xf32> to vector<8x128xf32>
    %33 = arith.mulf %22, %32 : vector<8x128xf32>
    %cst_30 = arith.constant dense<0.000000e+00> : vector<128xf32>
    %34 = vector.multi_reduction <add>, %33, %cst_30 [0] : vector<8x128xf32> to vector<128xf32>
    %35 = vector.shape_cast %34 : vector<128xf32> to vector<1x128xf32>
    %c3 = arith.constant 3 : index
    %c0_31 = arith.constant 0 : index
    %36 = vector.load %arg5[%c3, %c0_31] : memref<4x128xf32, #tpu.memory_space<vmem>>, vector<1x128xf32>
    %37 = arith.addf %36, %35 : vector<1x128xf32>
    %c3_32 = arith.constant 3 : index
    %c0_33 = arith.constant 0 : index
    %38 = vector.load %arg5[%c3_32, %c0_33] : memref<4x128xf32, #tpu.memory_space<vmem>>, vector<1x128xf32>
    tpu.vector_store %arg5[%c3_32, %c0_33], %37 {strides = array<i32>} : memref<4x128xf32, #tpu.memory_space<vmem>>, vector<1x128xf32>,
    %c0_i32_34 = arith.constant 0 : i32
    %39 = arith.cmpi eq, %arg0, %c0_i32_34 : i32
    %40 = arith.extui %39 : i1 to i32
    %c0_i32_35 = arith.constant 0 : i32
    %41 = arith.cmpi ne, %40, %c0_i32_35 : i32
    scf.if %41 {
      %c0_36 = arith.constant 0 : index
      %c0_37 = arith.constant 0 : index
      %42 = vector.load %arg5[%c0_36, %c0_37] : memref<4x128xf32, #tpu.memory_space<vmem>>, vector<4x128xf32>
      %cst_38 = arith.constant dense<0.000000e+00> : vector<4xf32>
      %43 = vector.multi_reduction <add>, %42, %cst_38 [1] : vector<4x128xf32> to vector<4xf32>
      %44 = vector.shape_cast %43 : vector<4xf32> to vector<4x1xf32>
      %c0_39 = arith.constant 0 : index
      %c0_40 = arith.constant 0 : index
      %45 = vector.load %arg3[%c0_39, %c0_40] : memref<4x1xf32, #tpu.memory_space<vmem>>, vector<4x1xf32>
      %46 = arith.addf %44, %45 : vector<4x1xf32>
      %c0_41 = arith.constant 0 : index
      %c0_42 = arith.constant 0 : index
      %47 = vector.load %arg4[%c0_41, %c0_42] : memref<4x1xf32, #tpu.memory_space<vmem>>, vector<4x1xf32>
      tpu.vector_store %arg4[%c0_41, %c0_42], %46 {strides = array<i32>} : memref<4x1xf32, #tpu.memory_space<vmem>>, vector<4x1xf32>,
    } else {
    }
    return
  }
  func.func @transform_0(%arg0: i32) -> (i32, i32, i32) {
    %c0_i32 = arith.constant 0 : i32
    %c0_i32_0 = arith.constant 0 : i32
    %c0_i32_1 = arith.constant 0 : i32
    return %c0_i32, %arg0, %c0_i32_0 : i32, i32, i32
  }
  func.func @transform_1(%arg0: i32) -> (i32, i32, i32) {
    %c0_i32 = arith.constant 0 : i32
    %c0_i32_0 = arith.constant 0 : i32
    %c0_i32_1 = arith.constant 0 : i32
    return %c0_i32, %arg0, %c0_i32_0 : i32, i32, i32
  }
  func.func @transform_2(%arg0: i32) -> (i32, i32) {
    %c0_i32 = arith.constant 0 : i32
    %c0_i32_0 = arith.constant 0 : i32
    %c0_i32_1 = arith.constant 0 : i32
    return %c0_i32, %c0_i32_0 : i32, i32
  }
  func.func @transform_3(%arg0: i32) -> (i32, i32) {
    %c0_i32 = arith.constant 0 : i32
    %c0_i32_0 = arith.constant 0 : i32
    %c0_i32_1 = arith.constant 0 : i32
    return %c0_i32, %c0_i32_0 : i32, i32
  }
}

</mosaic_0001>

<llo_original>
// kernel: tpu_custom_call.1
$region0: #{tpu_custom_call.1}
  #allocation0 [shape = 'u32[]', space=smem, size = 0x4, offset = 0x4, fixed_abs, tag = 'smem constant byte address 0x4 - core index']
  #allocation1 [shape = 'u32[144,128]{1,0:T(1,128)}', space=vmem, size = 0x12000, scoped, tag = 'internal scratch']
  #allocation2 [shape = 'f32[4,128]{1,0:T(4,128)}', space=vmem, size = 0x800, scoped, tag = 'scratch operand']
  %s0 = inlined_call_operand.hbm [shape: f32[2,8,128], index: 0, kind: input, shape index: {}]
  %s1 = inlined_call_operand.hbm [shape: f32[2,8,128], index: 1, kind: input, shape index: {}]
  %s2 = inlined_call_operand.vmem [shape: f32[4,1], index: 2, kind: input, shape index: {}]
  %s3 = inlined_call_operand.vmem [shape: f32[4,1], index: 3, kind: output, shape index: {}]
  %s4 = sld [smem:[#allocation0]]
  $region38: #{tpu_custom_call.1} parent=0
    _
  %s6 = ssub.s32 1, %s4
  %s7 = scalar_select 0, %s6, %s4
  $region1: #{tpu_custom_call.1} parent=0
    #allocation3 [shape = 'u8[8192]{0}', space=vmem, size = 0x2000, scoped, tag = 'input window, operand 0, single buffered']
    #allocation4 [shape = 's32[1]{0}', space=sflag, size = 0x4, scoped, tag = 'scoped memory for tpu_custom_call.1']
    #allocation5 [shape = 'u8[8192]{0}', space=vmem, size = 0x2000, scoped, tag = 'input window, operand 1, single buffered']
    #allocation6 [shape = 's32[1]{0}', space=sflag, size = 0x4, scoped, tag = 'scoped memory for tpu_custom_call.1']
    %8 = vsyncpa [#allocation4], 0
    %9 = vsyncpa [#allocation6], 0
    // Predicated region
    $region2: #{tpu_custom_call.1} parent=1 // pred_check
      _
    $region3: #{tpu_custom_call.1} parent=1 // pred_check_branch
      %11 = sbr.rel (0) target = $region5
    $region4: #{tpu_custom_call.1} parent=1 // pred_region
      %s13 = ssub.s32 256, 256
      %14 = vsyncadd [#allocation4], %s13
      %s15 = sshll.u32 [#allocation3], 4
      %s16 = int_to_ptr.vmem [resolvable:$true] %s15
      %21 = dma.hbm_to_vmem [thread:$0]  %s0, 256, %s16, [#allocation4], 128, 128, 8
    $region5: #{tpu_custom_call.1} parent=1 // pred_fallthru
      _
    // Predicated region
    $region6: #{tpu_custom_call.1} parent=1 // pred_check
      _
    $region7: #{tpu_custom_call.1} parent=1 // pred_check_branch
      %23 = sbr.rel (0) target = $region9
    $region8: #{tpu_custom_call.1} parent=1 // pred_region
      %s25 = ssub.s32 256, 256
      %26 = vsyncadd [#allocation6], %s25
      %s27 = sshll.u32 [#allocation5], 4
      %s28 = int_to_ptr.vmem [resolvable:$true] %s27
      %33 = dma.hbm_to_vmem [thread:$0]  %s1, 256, %s28, [#allocation6], 128, 128, 8
    $region9: #{tpu_custom_call.1} parent=1 // pred_fallthru
      _
    // Predicated region
    $region10: #{tpu_custom_call.1} parent=1 // pred_check
      _
    $region11: #{tpu_custom_call.1} parent=1 // pred_check_branch
      %35 = sbr.rel (0) target = $region13
    $region12: #{tpu_custom_call.1} parent=1 // pred_region
      _
    $region13: #{tpu_custom_call.1} parent=1 // pred_fallthru
      _
    // Predicated region
    $region14: #{tpu_custom_call.1} parent=1 // pred_check
      _
    $region15: #{tpu_custom_call.1} parent=1 // pred_check_branch
      %37 = sbr.rel (0) target = $region17
    $region16: #{tpu_custom_call.1} parent=1 // pred_region
      %38 = dma.done [#allocation4], 256
    $region17: #{tpu_custom_call.1} parent=1 // pred_fallthru
      _
    // Predicated region
    $region18: #{tpu_custom_call.1} parent=1 // pred_check
      _
    $region19: #{tpu_custom_call.1} parent=1 // pred_check_branch
      %40 = sbr.rel (0) target = $region21
    $region20: #{tpu_custom_call.1} parent=1 // pred_region
      %41 = dma.done [#allocation6], 256
    $region21: #{tpu_custom_call.1} parent=1 // pred_fallthru
      _
    %p42 = scmp.eq.s32.totalorder 0, 0
    // Predicated region
    $region22: #{tpu_custom_call.1} parent=1 // pred_check
      %p43 = pneg %p42
    $region23: #{tpu_custom_call.1} parent=1 // pred_check_branch
      %45 = sbr.rel (%p43) target = $region25
    $region24: #{tpu_custom_call.1} parent=1 // pred_region
      %46 = vst [vmem:[#allocation2] sm:$0xf] 0.0
    $region25: #{tpu_custom_call.1} parent=1 // pred_fallthru
      _
    %v47 = vld [vmem:[#allocation3] sm:$0xff]
    %v48 = vld [vmem:[#allocation5] sm:$0xff]
    %v49 = vmul.f32 %v47, %v48
    %v50 = vrot.slane %v49, 4
    %v51 = vadd.f32 %v49, %v50
    %v52 = vrot.slane %v51, 2
    %v53 = vadd.f32 %v51, %v52
    %v54 = vrot.slane %v53, 1
    %v55 = vadd.f32 %v53, %v54
    %v56 = vld [vmem:[#allocation2] sm:$0x1]
    %v57 = vadd.f32 %v56, %v55
    %58 = vst [vmem:[#allocation2] sm:$0x1] %v57
    %s59 = scalar_lea.vmem [#allocation5], 8
    %v60 = vld [vmem:[%s59] sm:$0xff]
    %v61 = vmul.f32 %v47, %v60
    %v62 = vrot.slane %v61, 4
    %v63 = vadd.f32 %v61, %v62
    %v64 = vrot.slane %v63, 2
    %v65 = vadd.f32 %v63, %v64
    %v66 = vrot.slane %v65, 1
    %v67 = vadd.f32 %v65, %v66
    %v68 = vld [vmem:[#allocation2 + $0x1] sm:$0x1]
    %v69 = vadd.f32 %v68, %v67
    %70 = vst [vmem:[#allocation2 + $0x1] sm:$0x1] %v69
    %s71 = scalar_lea.vmem [#allocation3], 8
    %v72 = vld [vmem:[%s71] sm:$0xff]
    %v73 = vld [vmem:[#allocation5] sm:$0xff]
    %v74 = vmul.f32 %v72, %v73
    %v75 = vrot.slane %v74, 4
    %v76 = vadd.f32 %v74, %v75
    %v77 = vrot.slane %v76, 2
    %v78 = vadd.f32 %v76, %v77
    %v79 = vrot.slane %v78, 1
    %v80 = vadd.f32 %v78, %v79
    %v81 = vld [vmem:[#allocation2 + $0x2] sm:$0x1]
    %v82 = vadd.f32 %v81, %v80
    %83 = vst [vmem:[#allocation2 + $0x2] sm:$0x1] %v82
    %v84 = vld [vmem:[%s59] sm:$0xff]
    %v85 = vmul.f32 %v72, %v84
    %v86 = vrot.slane %v85, 4
    %v87 = vadd.f32 %v85, %v86
    %v88 = vrot.slane %v87, 2
    %v89 = vadd.f32 %v87, %v88
    %v90 = vrot.slane %v89, 1
    %v91 = vadd.f32 %v89, %v90
    %v92 = vld [vmem:[#allocation2 + $0x3] sm:$0x1]
    %v93 = vadd.f32 %v92, %v91
    %94 = vst [vmem:[#allocation2 + $0x3] sm:$0x1] %v93
    // Predicated region
    $region26: #{tpu_custom_call.1} parent=1 // pred_check
      %p95 = pneg %p42
    $region27: #{tpu_custom_call.1} parent=1 // pred_check_branch
      %97 = sbr.rel (%p95) target = $region29
    $region28: #{tpu_custom_call.1} parent=1 // pred_region
      %v98 = vld [vmem:[#allocation2] sm:$0xf]
      %vm99 = vcmask 1043456
      %v100 = vsel %vm99, %v98, 0.0
      %101 = vadd.xlane.f32.xlu0 %v100
      %v102 = vpop.xlane.xlu0 %101
      %v103 = vld [vmem:[%s2] sm:$0xf]
      %v104 = vadd.f32 %v102, %v103
      %vm105 = vcmask 3072
      %106 = vst.msk [vmem:[%s3] sm:$0xf] %vm105, %v104
    $region29: #{tpu_custom_call.1} parent=1 // pred_fallthru
      _
    // Predicated region
    $region30: #{tpu_custom_call.1} parent=1 // pred_check
      _
    $region31: #{tpu_custom_call.1} parent=1 // pred_check_branch
      %108 = sbr.rel (0) target = $region33
    $region32: #{tpu_custom_call.1} parent=1 // pred_region
      _
    $region33: #{tpu_custom_call.1} parent=1 // pred_fallthru
      _
    // Predicated region
    $region34: #{tpu_custom_call.1} parent=1 // pred_check
      _
    $region35: #{tpu_custom_call.1} parent=1 // pred_check_branch
      %110 = sbr.rel (0) target = $region37
    $region36: #{tpu_custom_call.1} parent=1 // pred_region
      _
    $region37: #{tpu_custom_call.1} parent=1 // pred_fallthru
      _
    %111 = vsyncpa [#allocation4], 1
    %112 = vsyncpa [#allocation6], 1

</llo_original>
